<compile_context>
chip_gen: v5e
topology: v5e:2x2
jax: 0.10.0
libtpu: 0.0.40
codegen_flags: <defaults>
</compile_context>

<pallas_src>
import functools

import jax
import jax.numpy as jnp
from jax.experimental import pallas as pl
from jax.experimental.pallas import tpu as pltpu


def _round_up(x, m):
    return ((x + m - 1) // m) * m


# ----------------------------------------------------------------------------
# Kernel: per-batch-tile label-smoothing loss, accumulated into the resident
# per-core (tile_rows, 1) output block.
# ----------------------------------------------------------------------------
def _label_smoothing_kernel(pred_ref, tgt_ref, out_ref, *,
                            num_classes, batch, tile_rows, tiles_per_core,
                            confidence, smooth_val):
    p = pl.program_id(0)          # core-split axis ("parallel")
    i = pl.program_id(1)          # batch-tile axis ("arbitrary", reduction)
    t = p * tiles_per_core + i    # global (unclamped) batch-tile index

    @pl.when(i == 0)
    def _init():
        out_ref[...] = jnp.zeros_like(out_ref)

    # Upcast in-kernel: HBM traffic stays at the caller's dtype (bf16-friendly).
    x = pred_ref[...].astype(jnp.float32)                              # (TR, C)
    tgt = jnp.clip(tgt_ref[...].astype(jnp.int32), 0, num_classes - 1)  # (TR, 1)

    tr, nc = x.shape
    col_ids = jax.lax.broadcasted_iota(jnp.int32, (tr, nc), 1)
    row_ids = jax.lax.broadcasted_iota(jnp.int32, (tr, 1), 0)
    # Rows past the real batch (ragged last tile / clamped overshoot tiles of
    # the second core) are discarded.  The class dim is full-extent
    # (= num_classes) so Mosaic's masked reductions already exclude the
    # physical pad lanes of the last vreg.
    row_mask = (t * tile_rows + row_ids) < batch

    # log_softmax fused with the smoothing-weighted reduction:
    #   loss_row = -sum_c w_c * (shifted_c - log(denom))
    #            = log(denom) - sum_c w_c * shifted_c      (since sum_c w_c == 1)
    row_max = jnp.max(x, axis=1, keepdims=True)
    shifted = x - row_max
    denom = jnp.sum(jnp.exp(shifted), axis=1, keepdims=True)
    w = jnp.where(col_ids == tgt, confidence, smooth_val)   # one-hot, no scatter
    per_row = jnp.log(denom) - jnp.sum(w * shifted, axis=1, keepdims=True)

    out_ref[...] += jnp.where(row_mask, per_row, 0.0)


# ----------------------------------------------------------------------------
# Wrapper: one gridded pallas_call, tiny final reduction + mean in the wrapper.
# ----------------------------------------------------------------------------
def label_smoothing_loss(pred, target, *, smoothing=0.1, _max_tile_rows=2048):
    pred = jnp.asarray(pred)
    if not jnp.issubdtype(pred.dtype, jnp.floating):
        pred = pred.astype(jnp.float32)
    target = jnp.asarray(target, jnp.int32)
    batch, num_classes = pred.shape
    confidence = 1.0 - smoothing
    smooth_val = smoothing / (num_classes - 1)

    # Batch tile: multiple of 8 sublanes, ~8 MiB of f32 working set per tile
    # (double-buffered input + a handful of f32 temporaries stay well under the
    # 48 MiB VMEM limit below -> safe on v7x's 64 MiB/TC, generous on v5e/v6e),
    # capped at 2048 rows for tiny class counts.
    rows_budget = max(8, ((8 * 1024 * 1024) // (num_classes * 4)) // 8 * 8)
    tile_rows = min(_max_tile_rows, rows_budget, _round_up(batch, 8))
    num_tiles = pl.cdiv(batch, tile_rows)

    # Split the batch tiles across TensorCores (v7x megacore); on single-TC
    # chips the leading "parallel" axis is just a short serial loop.
    num_cores = 2 if num_tiles >= 2 else 1
    tiles_per_core = pl.cdiv(num_tiles, num_cores)

    def tile_idx(p, i):
        # Clamp so the overshoot tile of the last core stays in-bounds; its rows
        # are masked out inside the kernel (t*tile_rows >= batch there).
        return jnp.minimum(p * tiles_per_core + i, num_tiles - 1)

    kernel = functools.partial(
        _label_smoothing_kernel,
        num_classes=num_classes, batch=batch, tile_rows=tile_rows,
        tiles_per_core=tiles_per_core,
        confidence=confidence, smooth_val=smooth_val)

    partials = pl.pallas_call(
        kernel,
        out_shape=jax.ShapeDtypeStruct((num_cores * tile_rows, 1), jnp.float32),
        grid_spec=pltpu.PrefetchScalarGridSpec(
            num_scalar_prefetch=0,
            grid=(num_cores, tiles_per_core),
            in_specs=[
                # Full-extent class dim: no wrapper-side lane padding / copies.
                pl.BlockSpec((tile_rows, num_classes),
                             lambda p, i: (tile_idx(p, i), 0)),
                pl.BlockSpec((tile_rows, 1),
                             lambda p, i: (tile_idx(p, i), 0)),
            ],
            # Per-core (tile_rows, 1) accumulator, resident in VMEM across the
            # reduction axis; written back to HBM once per core sweep.
            out_specs=pl.BlockSpec((tile_rows, 1), lambda p, i: (p, 0)),
        ),
        compiler_params=pltpu.CompilerParams(
            dimension_semantics=("parallel", "arbitrary"),
            vmem_limit_bytes=48 * 1024 * 1024,
        ),
        cost_estimate=pl.CostEstimate(
            flops=6 * batch * num_classes,
            transcendentals=batch * (num_classes + 1),
            bytes_accessed=int(pred.size) * pred.dtype.itemsize
                           + int(target.size) * 4 + num_cores * tile_rows * 4,
        ),
    )(pred, target.reshape(batch, 1))

    # Tiny final reduction + mean (keeps the kernel race-free across cores and
    # bounds f32 accumulation drift by summing per-row partials once).
    return jnp.sum(partials) / batch


def _reference(pred, target, smoothing):
    pred = jnp.asarray(pred, jnp.float32)
    batch, classes = pred.shape
    lp = jax.nn.log_softmax(pred, axis=1)
    true_dist = jnp.full((batch, classes), smoothing / (classes - 1), jnp.float32)
    true_dist = true_dist.at[jnp.arange(batch), target].set(1.0 - smoothing)
    return jnp.mean(jnp.sum(-true_dist * lp, axis=1))


if __name__ == "__main__":
    key = jax.random.PRNGKey(0)
    k1, k2, k3, k4 = jax.random.split(key, 4)

    # 1) Small shape consistent with the module: logits (batch, classes) + ints.
    batch, classes, smoothing = 8, 21, 0.1
    pred = 3.0 * jax.random.normal(k1, (batch, classes), dtype=jnp.float32)
    target = jax.random.randint(k2, (batch,), 0, classes, dtype=jnp.int32)
    loss = jax.block_until_ready(label_smoothing_loss(pred, target, smoothing=smoothing))
    loss_ref = _reference(pred, target, smoothing)
    assert loss.shape == () and loss.dtype == jnp.float32
    assert bool(jnp.isfinite(loss))
    assert abs(float(loss) - float(loss_ref)) < 1e-4, (float(loss), float(loss_ref))

    # 2) Ragged batch + forced small tiles -> exercises multi-tile grid, the
    #    two-core split, tile-index clamping and row masking.
    b2, c2, s2 = 53, 37, 0.2
    pred2 = 2.0 * jax.random.normal(k3, (b2, c2), dtype=jnp.float32)
    target2 = jax.random.randint(k4, (b2,), 0, c2, dtype=jnp.int32)
    loss2 = jax.block_until_ready(
        label_smoothing_loss(pred2, target2, smoothing=s2, _max_tile_rows=16))
    loss2_ref = _reference(pred2, target2, s2)
    assert abs(float(loss2) - float(loss2_ref)) < 1e-4, (float(loss2), float(loss2_ref))

    # 3) bf16 logits path (upcast happens inside the kernel).
    pred_bf = pred.astype(jnp.bfloat16)
    loss3 = jax.block_until_ready(
        label_smoothing_loss(pred_bf, target, smoothing=smoothing))
    loss3_ref = _reference(pred_bf.astype(jnp.float32), target, smoothing)
    assert abs(float(loss3) - float(loss3_ref)) < 1e-3, (float(loss3), float(loss3_ref))

    print("KERNEL_OK")
</pallas_src>

<mosaic_0001>
module attributes {stable_mosaic.version = 11 : i64} {
  func.func @_label_smoothing_kernel(%arg0: i32, %arg1: i32, %arg2: memref<8x21xf32, #tpu.memory_space<vmem>>, %arg3: memref<8x1xi32, #tpu.memory_space<vmem>>, %arg4: memref<8x1xf32, #tpu.memory_space<vmem>>) attributes {dimension_semantics = [#tpu.dimension_semantics<parallel>, #tpu.dimension_semantics<arbitrary>], iteration_bounds = array<i64: 1, 1>, scalar_prefetch = 0 : i64, scratch_operands = 0 : i64, tpu.core_type = #tpu.core_type<tc>, window_params = [{transform_indices = @transform_0, window_bounds = array<i64: 8, 21>}, {transform_indices = @transform_1, window_bounds = array<i64: 8, 1>}, {transform_indices = @transform_2, window_bounds = array<i64: 8, 1>}]} {
    %c1_i32 = arith.constant 1 : i32
    %0 = arith.muli %arg0, %c1_i32 : i32
    %1 = arith.addi %0, %arg1 : i32
    %c0_i32 = arith.constant 0 : i32
    %2 = arith.cmpi eq, %arg1, %c0_i32 : i32
    %3 = arith.extui %2 : i1 to i32
    %c0_i32_0 = arith.constant 0 : i32
    %4 = arith.cmpi ne, %3, %c0_i32_0 : i32
    scf.if %4 {
      %cst_15 = arith.constant 0.000000e+00 : f32
      %40 = vector.broadcast %cst_15 : f32 to vector<8x1xf32>
      %c0_16 = arith.constant 0 : index
      %c0_17 = arith.constant 0 : index
      %41 = vector.load %arg4[%c0_16, %c0_17] : memref<8x1xf32, #tpu.memory_space<vmem>>, vector<8x1xf32>
      tpu.vector_store %arg4[%c0_16, %c0_17], %40 {strides = array<i32>} : memref<8x1xf32, #tpu.memory_space<vmem>>, vector<8x1xf32>,
    } else {
    }
    %c0 = arith.constant 0 : index
    %c0_1 = arith.constant 0 : index
    %5 = vector.load %arg2[%c0, %c0_1] : memref<8x21xf32, #tpu.memory_space<vmem>>, vector<8x21xf32>
    %c0_2 = arith.constant 0 : index
    %c0_3 = arith.constant 0 : index
    %6 = vector.load %arg3[%c0_2, %c0_3] : memref<8x1xi32, #tpu.memory_space<vmem>>, vector<8x1xi32>
    %c0_i32_4 = arith.constant 0 : i32
    %c20_i32 = arith.constant 20 : i32
    %7 = vector.broadcast %c0_i32_4 : i32 to vector<8x1xi32>
    %8 = arith.maxsi %7, %6 : vector<8x1xi32>
    %9 = vector.broadcast %c20_i32 : i32 to vector<8x1xi32>
    %10 = arith.minsi %9, %8 : vector<8x1xi32>
    %11 = tpu.iota {dimensions = array<i32: 1>} : vector<8x21xi32>
    %12 = tpu.iota {dimensions = array<i32: 0>} : vector<8x1xi32>
    %c8_i32 = arith.constant 8 : i32
    %13 = arith.muli %1, %c8_i32 : i32
    %14 = vector.broadcast %13 : i32 to vector<8x1xi32>
    %15 = arith.addi %14, %12 : vector<8x1xi32>
    %c8_i32_5 = arith.constant 8 : i32
    %16 = vector.broadcast %c8_i32_5 : i32 to vector<8x1xi32>
    %17 = arith.cmpi slt, %15, %16 : vector<8x1xi32>
    %cst = arith.constant dense<0xFF800000> : vector<8xf32>
    %18 = vector.multi_reduction <maximumf>, %5, %cst [1] : vector<8x21xf32> to vector<8xf32>
    %19 = vector.shape_cast %18 : vector<8xf32> to vector<8x1xf32>
    %20 = vector.broadcast %19 : vector<8x1xf32> to vector<8x21xf32>
    %21 = arith.subf %5, %20 : vector<8x21xf32>
    %22 = math.exp %21 : vector<8x21xf32>
    %cst_6 = arith.constant dense<0.000000e+00> : vector<8xf32>
    %23 = vector.multi_reduction <add>, %22, %cst_6 [1] : vector<8x21xf32> to vector<8xf32>
    %24 = vector.shape_cast %23 : vector<8xf32> to vector<8x1xf32>
    %25 = vector.broadcast %10 : vector<8x1xi32> to vector<8x21xi32>
    %26 = arith.cmpi eq, %11, %25 : vector<8x21xi32>
    %cst_7 = arith.constant 0.899999976 : f32
    %cst_8 = arith.constant 5.000000e-03 : f32
    %27 = vector.broadcast %cst_7 : f32 to vector<8x21xf32>
    %28 = vector.broadcast %cst_8 : f32 to vector<8x21xf32>
    %29 = arith.select %26, %27, %28 : vector<8x21xi1>, vector<8x21xf32>
    %30 = math.log %24 : vector<8x1xf32>
    %31 = arith.mulf %29, %21 : vector<8x21xf32>
    %cst_9 = arith.constant dense<0.000000e+00> : vector<8xf32>
    %32 = vector.multi_reduction <add>, %31, %cst_9 [1] : vector<8x21xf32> to vector<8xf32>
    %33 = vector.shape_cast %32 : vector<8xf32> to vector<8x1xf32>
    %34 = arith.subf %30, %33 : vector<8x1xf32>
    %c0_10 = arith.constant 0 : index
    %c0_11 = arith.constant 0 : index
    %35 = vector.load %arg4[%c0_10, %c0_11] : memref<8x1xf32, #tpu.memory_space<vmem>>, vector<8x1xf32>
    %cst_12 = arith.constant 0.000000e+00 : f32
    %36 = vector.broadcast %cst_12 : f32 to vector<8x1xf32>
    %37 = arith.select %17, %34, %36 : vector<8x1xi1>, vector<8x1xf32>
    %38 = arith.addf %35, %37 : vector<8x1xf32>
    %c0_13 = arith.constant 0 : index
    %c0_14 = arith.constant 0 : index
    %39 = vector.load %arg4[%c0_13, %c0_14] : memref<8x1xf32, #tpu.memory_space<vmem>>, vector<8x1xf32>
    tpu.vector_store %arg4[%c0_13, %c0_14], %38 {strides = array<i32>} : memref<8x1xf32, #tpu.memory_space<vmem>>, vector<8x1xf32>,
    return
  }
  func.func @transform_0(%arg0: i32, %arg1: i32) -> (i32, i32) {
    %c1_i32 = arith.constant 1 : i32
    %0 = arith.muli %arg0, %c1_i32 : i32
    %1 = arith.addi %0, %arg1 : i32
    %c0_i32 = arith.constant 0 : i32
    %2 = arith.minsi %1, %c0_i32 : i32
    %c0_i32_0 = arith.constant 0 : i32
    %c0_i32_1 = arith.constant 0 : i32
    return %2, %c0_i32_0 : i32, i32
  }
  func.func @transform_1(%arg0: i32, %arg1: i32) -> (i32, i32) {
    %c1_i32 = arith.constant 1 : i32
    %0 = arith.muli %arg0, %c1_i32 : i32
    %1 = arith.addi %0, %arg1 : i32
    %c0_i32 = arith.constant 0 : i32
    %2 = arith.minsi %1, %c0_i32 : i32
    %c0_i32_0 = arith.constant 0 : i32
    %c0_i32_1 = arith.constant 0 : i32
    return %2, %c0_i32_0 : i32, i32
  }
  func.func @transform_2(%arg0: i32, %arg1: i32) -> (i32, i32) {
    %c0_i32 = arith.constant 0 : i32
    %c0_i32_0 = arith.constant 0 : i32
    return %arg0, %c0_i32 : i32, i32
  }
}

</mosaic_0001>

<llo_original>
// kernel: tpu_custom_call.1
$region0: #{tpu_custom_call.1}
  #allocation0 [shape = 'u32[]', space=smem, size = 0x4, offset = 0x4, fixed_abs, tag = 'smem constant byte address 0x4 - core index']
  #allocation1 [shape = 'u32[72,128]{1,0:T(1,128)}', space=vmem, size = 0x9000, scoped, tag = 'internal scratch']
  %s0 = inlined_call_operand.vmem [shape: f32[8,21], index: 0, kind: input, shape index: {}]
  %s1 = inlined_call_operand.vmem [shape: s32[8,1], index: 1, kind: input, shape index: {}]
  %s2 = inlined_call_operand.vmem [shape: f32[8,1], index: 2, kind: output, shape index: {}]
  %s3 = sld [smem:[#allocation0]]
  $region22: #{tpu_custom_call.1} parent=0
    _
  %s5 = ssub.s32 1, %s3
  %s6 = scalar_select 0, %s5, %s3
  // Predicated region
  $region2: #{tpu_custom_call.1} parent=0 // pred_check
    _
  $region3: #{tpu_custom_call.1} parent=0 // pred_check_branch
    %8 = sbr.rel (0) target = $region5
  $region4: #{tpu_custom_call.1} parent=0 // pred_region
    %s9 = sadd.s32 0, 0
    %p10 = scmp.lt.s32.totalorder %s9, 0
    %s11 = scalar_select %p10, %s9, 0
    %p12 = scmp.lt.s32.totalorder %s11, 0
    %s13 = scalar_select %p12, %s11, 0
    %s14 = smul.addr %s13, 8
    %s15 = scalar_lea.vmem %s0, %s14
    %s16 = sadd.s32 0, 0
    %p17 = scmp.lt.s32.totalorder %s16, 0
    %s18 = scalar_select %p17, %s16, 0
  $region5: #{tpu_custom_call.1} parent=0 // pred_fallthru
    _
  // Predicated region
  $region6: #{tpu_custom_call.1} parent=0 // pred_check
    _
  $region7: #{tpu_custom_call.1} parent=0 // pred_check_branch
    %20 = sbr.rel (0) target = $region9
  $region8: #{tpu_custom_call.1} parent=0 // pred_region
    %s21 = sadd.s32 0, 0
    %p22 = scmp.lt.s32.totalorder %s21, 0
    %s23 = scalar_select %p22, %s21, 0
    %p24 = scmp.lt.s32.totalorder %s23, 0
    %s25 = scalar_select %p24, %s23, 0
    %s26 = smul.addr %s25, 8
    %s27 = scalar_lea.vmem %s1, %s26
    %s28 = sadd.s32 0, 0
    %p29 = scmp.lt.s32.totalorder %s28, 0
    %s30 = scalar_select %p29, %s28, 0
  $region9: #{tpu_custom_call.1} parent=0 // pred_fallthru
    _
  %s31 = sadd.s32 0, 0
  %p32 = scmp.lt.s32.totalorder %s31, 0
  %s33 = scalar_select %p32, %s31, 0
  %p34 = scmp.lt.s32.totalorder %s33, 0
  %s35 = scalar_select %p34, %s33, 0
  %s36 = smul.addr %s35, 8
  %s37 = scalar_lea.vmem %s0, %s36
  %s38 = sadd.s32 0, 0
  %p39 = scmp.lt.s32.totalorder %s38, 0
  %s40 = scalar_select %p39, %s38, 0
  %p41 = scmp.lt.s32.totalorder %s40, 0
  %s42 = scalar_select %p41, %s40, 0
  %s43 = smul.addr %s42, 8
  %s44 = scalar_lea.vmem %s1, %s43
  %s45 = sadd.s32 0, 0
  %p46 = scmp.lt.s32.totalorder %s45, 0
  %s47 = scalar_select %p46, %s45, 0
  %p48 = scmp.lt.s32.totalorder %s47, 0
  %s49 = scalar_select %p48, %s47, 0
  %s50 = smul.addr %s49, 8
  %s51 = scalar_lea.vmem %s0, %s50
  %s52 = sadd.s32 0, 0
  %p53 = scmp.lt.s32.totalorder %s52, 0
  %s54 = scalar_select %p53, %s52, 0
  %s55 = sadd.s32 0, 0
  %p56 = scmp.lt.s32.totalorder %s55, 0
  %s57 = scalar_select %p56, %s55, 0
  %p58 = scmp.lt.s32.totalorder %s57, 0
  %s59 = scalar_select %p58, %s57, 0
  %s60 = smul.addr %s59, 8
  %s61 = scalar_lea.vmem %s1, %s60
  %s62 = sadd.s32 0, 0
  %p63 = scmp.lt.s32.totalorder %s62, 0
  %s64 = scalar_select %p63, %s62, 0
  %s65 = sadd.s32 0, 0
  %p66 = scmp.eq.s32.totalorder 0, 0
  // Predicated region
  $region10: #{tpu_custom_call.1} parent=0 // pred_check
    %p67 = pneg %p66
  $region11: #{tpu_custom_call.1} parent=0 // pred_check_branch
    %69 = sbr.rel (%p67) target = $region13
  $region12: #{tpu_custom_call.1} parent=0 // pred_region
    %vm70 = vcmask 7168
    %71 = vst.msk [vmem:[%s2] sm:$0xff] %vm70, 0.0
  $region13: #{tpu_custom_call.1} parent=0 // pred_fallthru
    _
  %v72 = vld [vmem:[%s51] sm:$0xff]
  %v73 = vld [vmem:[%s61] sm:$0xff]
  %vm74 = vcmp.gt.s32.totalorder %v73, 0
  %v75 = vsel %vm74, %v73, 0
  %vm76 = vcmp.lt.s32.totalorder %v75, 20
  %v77 = vsel %vm76, %v75, 20
  %v78 = vlaneseq
  %v79 = vand.u32 %v78, 127
  %v80 = vlaneseq
  %v81 = vshrl.u32 %v80, 7
  %s82 = smul.u32 %s65, 8
  %v83 = vstv %s82
  %v84 = vadd.s32 %v83, %v81
  %vm85 = vcmp.lt.s32.totalorder %v84, 8
  %vm86 = vcmask 171008
  %v87 = vsel %vm86, %v72, -inf
  %88 = vmax.xlane.f32.xlu0 %v87
  %v89 = vpop.xlane.xlu0 %88
  %v90 = vsub.f32 %v72, %v89
  %v91 = vmul.f32 %v90, 1.442695
  %v92 = vpow.pop %v91
  %v93 = vsel %vm86, %v92, 0.0
  %94 = vadd.xlane.f32.xlu0 %v93
  %v95 = vpop.xlane.xlu0 %94
  %96 = vset.pattern.permute.xlu0 0
  %97 = vperm.xlu0 %96, %v77
  %v98 = vpop.permute.xlu0 %97
  %vm99 = vcmp.eq.s32.totalorder %v79, %v98
  %v100 = vsel %vm99, 0.9, 0.005
  %v101 = vlog2.pop %v95
  %v102 = vmul.f32 %v101, 0.6931472
  %v103 = vmul.f32 %v100, %v90
  %v104 = vsel %vm86, %v103, 0.0
  %105 = vadd.xlane.f32.xlu0 %v104
  %v106 = vpop.xlane.xlu0 %105
  %v107 = vsub.f32 %v102, %v106
  %v108 = vld [vmem:[%s2] sm:$0xff]
  %v109 = vsel %vm85, %v107, 0.0
  %v110 = vadd.f32 %v108, %v109
  %vm111 = vcmask 7168
  %112 = vst.msk [vmem:[%s2] sm:$0xff] %vm111, %v110
  // Predicated region
  $region14: #{tpu_custom_call.1} parent=0 // pred_check
    _
  $region15: #{tpu_custom_call.1} parent=0 // pred_check_branch
    %114 = sbr.rel (0) target = $region17
  $region16: #{tpu_custom_call.1} parent=0 // pred_region
    _
  $region17: #{tpu_custom_call.1} parent=0 // pred_fallthru
    _
  // Predicated region
  $region18: #{tpu_custom_call.1} parent=0 // pred_check
    _
  $region19: #{tpu_custom_call.1} parent=0 // pred_check_branch
    %116 = sbr.rel (0) target = $region21
  $region20: #{tpu_custom_call.1} parent=0 // pred_region
    _
  $region21: #{tpu_custom_call.1} parent=0 // pred_fallthru
    _

</llo_original>
